<compile_context>
chip_gen: v5e
topology: v5e:2x2
jax: 0.10.0
libtpu: 0.0.40
codegen_flags: <defaults>
</compile_context>

<pallas_src>
import functools

import jax
import jax.numpy as jnp
from jax.experimental import pallas as pl
from jax.experimental.pallas import tpu as pltpu

NEG_SLOPE = 0.01  # F.leaky_relu default negative_slope


def _round_up(x, m):
    return (x + m - 1) // m * m


def _leaky_relu(x):
    # max(x, 0.01*x) == leaky_relu(x) for slope in (0, 1): 2 VPU ops, no select.
    return jnp.maximum(x, NEG_SLOPE * x)


def fx_kernel(x_ref, w1_ref, b1_ref, w2_ref, b2_ref, w3_ref, b3_ref, o_ref):
    # MXU GEMMs in the weights' dtype (bf16 by default) with f32 accumulation;
    # bias add + LeakyReLU stay f32 (v5e VPU has no bf16 path).
    h = jnp.dot(x_ref[...].astype(w1_ref.dtype), w1_ref[...],
                preferred_element_type=jnp.float32)
    h = _leaky_relu(h + b1_ref[...])
    h = jnp.dot(h.astype(w2_ref.dtype), w2_ref[...],
                preferred_element_type=jnp.float32)
    h = _leaky_relu(h + b2_ref[...])
    h = jnp.dot(h.astype(w3_ref.dtype), w3_ref[...],
                preferred_element_type=jnp.float32)
    h = _leaky_relu(h + b3_ref[...])
    o_ref[...] = h.astype(o_ref.dtype)


def prepare_fx_params(w1, b1, w2, b2, w3, b3, *, compute_dtype=jnp.bfloat16):
    """One-time param prep (run at model init, NOT per forward call).

    Weights (already laid out (in, out)) are cast to the MXU compute dtype;
    biases stay f32 row vectors.  Pass compute_dtype=jnp.float32 if bit-close
    parity with the f32 torch module matters more than MXU throughput.
    """
    cast = lambda w: w.astype(compute_dtype)
    row = lambda b: b.reshape(1, -1).astype(jnp.float32)
    return (cast(w1), row(b1), cast(w2), row(b2), cast(w3), row(b3))


def _default_block_b(B):
    # bf16 LHS tiles pack 16 rows per vreg -> 16-row granularity.
    bp16 = _round_up(B, 16)
    if bp16 <= 32:
        return bp16  # tiny batch: single tile, minimal row padding
    # Cap at 256 rows (fills the 256-wide v6e/v7x MXU) but keep >=2 grid steps
    # so dimension_semantics=("parallel",) can shard across v7x's two TCs.
    return min(256, _round_up(bp16 // 2, 16))


@functools.partial(jax.jit, static_argnames=("block_b",))
def fx_forward(x, params, *, block_b=None):
    """x: (B, in_dim) f32; params: output of prepare_fx_params."""
    w1, b1, w2, b2, w3, b3 = params
    B, in_dim = x.shape
    H1 = w1.shape[1]
    H2 = w2.shape[1]
    out_dim = w3.shape[1]

    if block_b is None:
        block_b = _default_block_b(B)
    assert block_b % 8 == 0, "block_b must be a multiple of 8 (sublanes)"

    Bp = _round_up(B, block_b)
    # Pad batch rows only if needed (padded rows compute leaky_relu(bias)
    # garbage that is sliced off below; block_b default keeps padding small).
    x_p = x if Bp == B else jnp.pad(x, ((0, Bp - B), (0, 0)))
    nb = Bp // block_b

    # Weights/biases: fetched once, held in VMEM across all grid steps.
    # Buffered(1): a constant-index block never re-DMAs, so double-buffering it
    # would only waste VMEM (keeps resident-weights design viable on v7x 64MiB).
    def resident(a):
        return pl.BlockSpec(a.shape, lambda i: (0,) * a.ndim,
                            pipeline_mode=pl.Buffered(1))

    itemsize = lambda a: a.size * a.dtype.itemsize
    flops = 2 * Bp * (in_dim * H1 + H1 * H2 + H2 * out_dim)
    bytes_accessed = (
        Bp * in_dim * 4                                       # x (f32 in)
        + itemsize(w1) + itemsize(w2) + itemsize(w3)          # weights (bf16)
        + itemsize(b1) + itemsize(b2) + itemsize(b3)          # biases (f32)
        + Bp * out_dim * 4                                    # output (f32)
    )

    out = pl.pallas_call(
        fx_kernel,
        out_shape=jax.ShapeDtypeStruct((Bp, out_dim), jnp.float32),
        grid_spec=pltpu.PrefetchScalarGridSpec(
            num_scalar_prefetch=0,
            grid=(nb,),
            in_specs=[
                pl.BlockSpec((block_b, in_dim), lambda i: (i, 0)),  # x tile
                resident(w1), resident(b1),
                resident(w2), resident(b2),
                resident(w3), resident(b3),
            ],
            # out_dim (=16) equals the full last dim, so a narrow block is
            # legal; HBM writeback is exactly the bytes we need.
            out_specs=pl.BlockSpec((block_b, out_dim), lambda i: (i, 0)),
        ),
        compiler_params=pltpu.CompilerParams(
            dimension_semantics=("parallel",),
            vmem_limit_bytes=32 * 1024 * 1024,
        ),
        cost_estimate=pl.CostEstimate(
            flops=flops, transcendentals=0, bytes_accessed=bytes_accessed),
    )(x_p, w1, b1, w2, b2, w3, b3)

    return out if Bp == B else out[:B]


def init_linear(key, in_features, out_features):
    # Deterministic synthetic init (Kaiming-uniform-like bound, as in nn.Linear).
    kw, kb = jax.random.split(key)
    bound = 1.0 / jnp.sqrt(jnp.float32(in_features))
    # Stored already transposed: (in_features, out_features).
    w = jax.random.uniform(kw, (in_features, out_features), jnp.float32,
                           -bound, bound)
    b = jax.random.uniform(kb, (1, out_features), jnp.float32, -bound, bound)
    return w, b


def reference_forward(x, params):
    # Mirrors the kernel's dtype choices so tolerances can stay tight.
    w1, b1, w2, b2, w3, b3 = params
    h = _leaky_relu(jnp.dot(x.astype(w1.dtype), w1,
                            preferred_element_type=jnp.float32) + b1)
    h = _leaky_relu(jnp.dot(h.astype(w2.dtype), w2,
                            preferred_element_type=jnp.float32) + b2)
    h = _leaky_relu(jnp.dot(h.astype(w3.dtype), w3,
                            preferred_element_type=jnp.float32) + b3)
    return h


if __name__ == "__main__":
    # Small shapes consistent with the module: Fx(in_dim=32) with default
    # H1=512, H2=256, out_dim=16; batch=8.
    B, in_dim, H1, H2, out_dim = 8, 32, 512, 256, 16

    key = jax.random.PRNGKey(0)
    kx, k1, k2, k3 = jax.random.split(key, 4)

    x = jax.random.normal(kx, (B, in_dim), jnp.float32)
    w1, b1 = init_linear(k1, in_dim, H1)
    w2, b2 = init_linear(k2, H1, H2)
    w3, b3 = init_linear(k3, H2, out_dim)

    # One-time prep (bf16 MXU weights); per-call path does no casting/padding
    # of weights.
    params = prepare_fx_params(w1, b1, w2, b2, w3, b3)

    out = fx_forward(x, params)
    out = jax.block_until_ready(out)

    ref_bf16 = reference_forward(x, params)
    ref_f32 = _leaky_relu(
        _leaky_relu(_leaky_relu(x @ w1 + b1) @ w2 + b2) @ w3 + b3)

    assert out.shape == (B, out_dim)
    assert jnp.allclose(out, ref_bf16, atol=1e-3, rtol=1e-3), \
        "mismatch vs bf16-mirrored reference"
    assert jnp.allclose(out, ref_f32, atol=5e-2, rtol=5e-2), \
        "mismatch vs f32 reference"

    print("KERNEL_OK")
</pallas_src>

<mosaic_0001>
module attributes {stable_mosaic.version = 11 : i64} {
  func.func @fx_kernel(%arg0: i32, %arg1: memref<16x32xf32, #tpu.memory_space<vmem>>, %arg2: memref<32x512xbf16, #tpu.memory_space<vmem>>, %arg3: memref<1x512xf32, #tpu.memory_space<vmem>>, %arg4: memref<512x256xbf16, #tpu.memory_space<vmem>>, %arg5: memref<1x256xf32, #tpu.memory_space<vmem>>, %arg6: memref<256x16xbf16, #tpu.memory_space<vmem>>, %arg7: memref<1x16xf32, #tpu.memory_space<vmem>>, %arg8: memref<16x16xf32, #tpu.memory_space<vmem>>) attributes {dimension_semantics = [#tpu.dimension_semantics<parallel>], iteration_bounds = array<i64: 1>, scalar_prefetch = 0 : i64, scratch_operands = 0 : i64, tpu.core_type = #tpu.core_type<tc>, window_params = [{transform_indices = @transform_0, window_bounds = array<i64: 16, 32>}, {pipeline_mode = #tpu.pipeline_mode<synchronous>, transform_indices = @transform_1, window_bounds = array<i64: 32, 512>}, {pipeline_mode = #tpu.pipeline_mode<synchronous>, transform_indices = @transform_2, window_bounds = array<i64: 1, 512>}, {pipeline_mode = #tpu.pipeline_mode<synchronous>, transform_indices = @transform_3, window_bounds = array<i64: 512, 256>}, {pipeline_mode = #tpu.pipeline_mode<synchronous>, transform_indices = @transform_4, window_bounds = array<i64: 1, 256>}, {pipeline_mode = #tpu.pipeline_mode<synchronous>, transform_indices = @transform_5, window_bounds = array<i64: 256, 16>}, {pipeline_mode = #tpu.pipeline_mode<synchronous>, transform_indices = @transform_6, window_bounds = array<i64: 1, 16>}, {transform_indices = @transform_7, window_bounds = array<i64: 16, 16>}]} {
    %c0 = arith.constant 0 : index
    %c0_0 = arith.constant 0 : index
    %0 = vector.load %arg1[%c0, %c0_0] : memref<16x32xf32, #tpu.memory_space<vmem>>, vector<16x32xf32>
    %1 = arith.truncf %0 : vector<16x32xf32> to vector<16x32xbf16>
    %c0_1 = arith.constant 0 : index
    %c0_2 = arith.constant 0 : index
    %2 = vector.load %arg2[%c0_1, %c0_2] : memref<32x512xbf16, #tpu.memory_space<vmem>>, vector<32x512xbf16>
    %cst = arith.constant dense<0.000000e+00> : vector<16x512xf32>
    %3 = tpu.matmul %1, %2, %cst {dimension_numbers = #tpu.dot_dimension_numbers<[1], [0], [0], [1], [0, 0, 1, 1], [], []>} : vector<16x32xbf16>, vector<32x512xbf16>, vector<16x512xf32> -> vector<16x512xf32>
    %c0_3 = arith.constant 0 : index
    %c0_4 = arith.constant 0 : index
    %4 = vector.load %arg3[%c0_3, %c0_4] : memref<1x512xf32, #tpu.memory_space<vmem>>, vector<1x512xf32>
    %5 = vector.broadcast %4 : vector<1x512xf32> to vector<16x512xf32>
    %6 = arith.addf %3, %5 : vector<16x512xf32>
    %cst_5 = arith.constant 0.00999999977 : f32
    %7 = vector.broadcast %cst_5 : f32 to vector<16x512xf32>
    %8 = arith.mulf %7, %6 : vector<16x512xf32>
    %9 = arith.maximumf %6, %8 : vector<16x512xf32>
    %10 = arith.truncf %9 : vector<16x512xf32> to vector<16x512xbf16>
    %c0_6 = arith.constant 0 : index
    %c0_7 = arith.constant 0 : index
    %11 = vector.load %arg4[%c0_6, %c0_7] : memref<512x256xbf16, #tpu.memory_space<vmem>>, vector<512x256xbf16>
    %cst_8 = arith.constant dense<0.000000e+00> : vector<16x256xf32>
    %12 = tpu.matmul %10, %11, %cst_8 {dimension_numbers = #tpu.dot_dimension_numbers<[1], [0], [0], [1], [0, 0, 1, 1], [], []>} : vector<16x512xbf16>, vector<512x256xbf16>, vector<16x256xf32> -> vector<16x256xf32>
    %c0_9 = arith.constant 0 : index
    %c0_10 = arith.constant 0 : index
    %13 = vector.load %arg5[%c0_9, %c0_10] : memref<1x256xf32, #tpu.memory_space<vmem>>, vector<1x256xf32>
    %14 = vector.broadcast %13 : vector<1x256xf32> to vector<16x256xf32>
    %15 = arith.addf %12, %14 : vector<16x256xf32>
    %cst_11 = arith.constant 0.00999999977 : f32
    %16 = vector.broadcast %cst_11 : f32 to vector<16x256xf32>
    %17 = arith.mulf %16, %15 : vector<16x256xf32>
    %18 = arith.maximumf %15, %17 : vector<16x256xf32>
    %19 = arith.truncf %18 : vector<16x256xf32> to vector<16x256xbf16>
    %c0_12 = arith.constant 0 : index
    %c0_13 = arith.constant 0 : index
    %20 = vector.load %arg6[%c0_12, %c0_13] : memref<256x16xbf16, #tpu.memory_space<vmem>>, vector<256x16xbf16>
    %cst_14 = arith.constant dense<0.000000e+00> : vector<16x16xf32>
    %21 = tpu.matmul %19, %20, %cst_14 {dimension_numbers = #tpu.dot_dimension_numbers<[1], [0], [0], [1], [0, 0, 1, 1], [], []>} : vector<16x256xbf16>, vector<256x16xbf16>, vector<16x16xf32> -> vector<16x16xf32>
    %c0_15 = arith.constant 0 : index
    %c0_16 = arith.constant 0 : index
    %22 = vector.load %arg7[%c0_15, %c0_16] : memref<1x16xf32, #tpu.memory_space<vmem>>, vector<1x16xf32>
    %23 = vector.broadcast %22 : vector<1x16xf32> to vector<16x16xf32>
    %24 = arith.addf %21, %23 : vector<16x16xf32>
    %cst_17 = arith.constant 0.00999999977 : f32
    %25 = vector.broadcast %cst_17 : f32 to vector<16x16xf32>
    %26 = arith.mulf %25, %24 : vector<16x16xf32>
    %27 = arith.maximumf %24, %26 : vector<16x16xf32>
    %c0_18 = arith.constant 0 : index
    %c0_19 = arith.constant 0 : index
    %28 = vector.load %arg8[%c0_18, %c0_19] : memref<16x16xf32, #tpu.memory_space<vmem>>, vector<16x16xf32>
    tpu.vector_store %arg8[%c0_18, %c0_19], %27 {strides = array<i32>} : memref<16x16xf32, #tpu.memory_space<vmem>>, vector<16x16xf32>,
    return
  }
  func.func @transform_0(%arg0: i32) -> (i32, i32) {
    %c0_i32 = arith.constant 0 : i32
    %c0_i32_0 = arith.constant 0 : i32
    return %arg0, %c0_i32 : i32, i32
  }
  func.func @transform_1(%arg0: i32) -> (i32, i32) {
    %c0_i32 = arith.constant 0 : i32
    %c0_i32_0 = arith.constant 0 : i32
    %c0_i32_1 = arith.constant 0 : i32
    return %c0_i32, %c0_i32_0 : i32, i32
  }
  func.func @transform_2(%arg0: i32) -> (i32, i32) {
    %c0_i32 = arith.constant 0 : i32
    %c0_i32_0 = arith.constant 0 : i32
    %c0_i32_1 = arith.constant 0 : i32
    return %c0_i32, %c0_i32_0 : i32, i32
  }
  func.func @transform_3(%arg0: i32) -> (i32, i32) {
    %c0_i32 = arith.constant 0 : i32
    %c0_i32_0 = arith.constant 0 : i32
    %c0_i32_1 = arith.constant 0 : i32
    return %c0_i32, %c0_i32_0 : i32, i32
  }
  func.func @transform_4(%arg0: i32) -> (i32, i32) {
    %c0_i32 = arith.constant 0 : i32
    %c0_i32_0 = arith.constant 0 : i32
    %c0_i32_1 = arith.constant 0 : i32
    return %c0_i32, %c0_i32_0 : i32, i32
  }
  func.func @transform_5(%arg0: i32) -> (i32, i32) {
    %c0_i32 = arith.constant 0 : i32
    %c0_i32_0 = arith.constant 0 : i32
    %c0_i32_1 = arith.constant 0 : i32
    return %c0_i32, %c0_i32_0 : i32, i32
  }
  func.func @transform_6(%arg0: i32) -> (i32, i32) {
    %c0_i32 = arith.constant 0 : i32
    %c0_i32_0 = arith.constant 0 : i32
    %c0_i32_1 = arith.constant 0 : i32
    return %c0_i32, %c0_i32_0 : i32, i32
  }
  func.func @transform_7(%arg0: i32) -> (i32, i32) {
    %c0_i32 = arith.constant 0 : i32
    %c0_i32_0 = arith.constant 0 : i32
    return %arg0, %c0_i32 : i32, i32
  }
}

</mosaic_0001>

<llo_original>
// kernel: fx_forward.1
$region0: #{fx_forward.1}
  #allocation0 [shape = 'u32[]', space=smem, size = 0x4, offset = 0x4, fixed_abs, tag = 'smem constant byte address 0x4 - core index']
  #allocation1 [shape = 'u32[72,128]{1,0:T(1,128)}', space=vmem, size = 0x9000, scoped, tag = 'internal scratch']
  %s0 = inlined_call_operand.vmem [shape: f32[16,32], index: 0, kind: input, shape index: {}]
  %s1 = inlined_call_operand.vmem [shape: bf16[32,512], index: 1, kind: input, shape index: {}]
  %s2 = inlined_call_operand.vmem [shape: f32[1,512], index: 2, kind: input, shape index: {}]
  %s3 = inlined_call_operand.hbm [shape: bf16[512,256], index: 3, kind: input, shape index: {}]
  %s4 = inlined_call_operand.vmem [shape: f32[1,256], index: 4, kind: input, shape index: {}]
  %s5 = inlined_call_operand.vmem [shape: bf16[256,16], index: 5, kind: input, shape index: {}]
  %s6 = inlined_call_operand.vmem [shape: f32[1,16], index: 6, kind: input, shape index: {}]
  %s7 = inlined_call_operand.vmem [shape: f32[16,16], index: 7, kind: output, shape index: {}]
  %s8 = sld [smem:[#allocation0]]
  $region42: #{fx_forward.1} parent=0
    _
  %s10 = ssub.s32 1, %s8
  %s11 = scalar_select 0, %s10, %s8
  $region1: #{fx_forward.1} parent=0
    #allocation2 [shape = 'u8[262144]{0}', space=vmem, size = 0x40000, scoped, tag = 'input window, operand 3, single buffered']
    #allocation3 [shape = 's32[1]{0}', space=sflag, size = 0x4, scoped, tag = 'scoped memory for fx_forward.1']
    %12 = vsyncpa [#allocation3], 0
    // Predicated region
    $region2: #{fx_forward.1} parent=1 // pred_check
      _
    $region3: #{fx_forward.1} parent=1 // pred_check_branch
      %14 = sbr.rel (0) target = $region5
    $region4: #{fx_forward.1} parent=1 // pred_region
      _
    $region5: #{fx_forward.1} parent=1 // pred_fallthru
      _
    // Predicated region
    $region6: #{fx_forward.1} parent=1 // pred_check
      _
    $region7: #{fx_forward.1} parent=1 // pred_check_branch
      %16 = sbr.rel (0) target = $region9
    $region8: #{fx_forward.1} parent=1 // pred_region
      _
    $region9: #{fx_forward.1} parent=1 // pred_fallthru
      _
    // Predicated region
    $region10: #{fx_forward.1} parent=1 // pred_check
      _
    $region11: #{fx_forward.1} parent=1 // pred_check_branch
      %18 = sbr.rel (0) target = $region13
    $region12: #{fx_forward.1} parent=1 // pred_region
      _
    $region13: #{fx_forward.1} parent=1 // pred_fallthru
      _
    // Predicated region
    $region14: #{fx_forward.1} parent=1 // pred_check
      _
    $region15: #{fx_forward.1} parent=1 // pred_check_branch
      %20 = sbr.rel (0) target = $region17
    $region16: #{fx_forward.1} parent=1 // pred_region
      %22 = vsyncadd [#allocation3], 0
      %s23 = sshll.u32 %s3, 4
      %s24 = int_to_ptr.hbm [resolvable:$true] %s23
      %s25 = sshll.u32 [#allocation2], 4
      %s26 = int_to_ptr.vmem [resolvable:$true] %s25
      %31 = dma.hbm_to_vmem [thread:$0]  %s24, 8192, %s26, [#allocation3], 128, 128, 8
    $region17: #{fx_forward.1} parent=1 // pred_fallthru
      _
    // Predicated region
    $region18: #{fx_forward.1} parent=1 // pred_check
      _
    $region19: #{fx_forward.1} parent=1 // pred_check_branch
      %33 = sbr.rel (0) target = $region21
    $region20: #{fx_forward.1} parent=1 // pred_region
      _
    $region21: #{fx_forward.1} parent=1 // pred_fallthru
      _
    // Predicated region
    $region22: #{fx_forward.1} parent=1 // pred_check
      _
    $region23: #{fx_forward.1} parent=1 // pred_check_branch
      %35 = sbr.rel (0) target = $region25
    $region24: #{fx_forward.1} parent=1 // pred_region
      _
    $region25: #{fx_forward.1} parent=1 // pred_fallthru
      _
    // Predicated region
    $region26: #{fx_forward.1} parent=1 // pred_check
      _
    $region27: #{fx_forward.1} parent=1 // pred_check_branch
      %37 = sbr.rel (0) target = $region29
    $region28: #{fx_forward.1} parent=1 // pred_region
      _
    $region29: #{fx_forward.1} parent=1 // pred_fallthru
      _
    // Predicated region
    $region30: #{fx_forward.1} parent=1 // pred_check
      _
    $region31: #{fx_forward.1} parent=1 // pred_check_branch
      %39 = sbr.rel (0) target = $region33
    $region32: #{fx_forward.1} parent=1 // pred_region
      %41 = dma.done [#allocation3], 8192
    $region33: #{fx_forward.1} parent=1 // pred_fallthru
      _
    %v43 = vld [vmem:[%s0] sm:$0xff]
    %v44 = vld [vmem:[%s0 + $0x8] sm:$0xff]
    %v45 = vpack.c.bf16 %v44, %v43
    %v46 = vld [vmem:[%s1] sm:$0xff]
    %v47 = vld [vmem:[%s1 + $0x8] sm:$0xff]
    %v48 = vld [vmem:[%s1 + $0x10] sm:$0xff]
    %v49 = vld [vmem:[%s1 + $0x18] sm:$0xff]
    %v50 = vld [vmem:[%s1 + $0x20] sm:$0xff]
    %v51 = vld [vmem:[%s1 + $0x28] sm:$0xff]
    %v52 = vld [vmem:[%s1 + $0x30] sm:$0xff]
    %v53 = vld [vmem:[%s1 + $0x38] sm:$0xff]
    %v54 = vld [vmem:[%s2] sm:$0xf]
    %v56 = vperm.slane %v54, 0
    %v57 = vperm.slane %v54, 1
    %v58 = vperm.slane %v54, 2
    %v59 = vperm.slane %v54, 3
    %v72 = vunpack.c.l.b16 %v46
    %v73 = vunpack.c.h.b16 %v46
    %v74 = vunpack.c.l.b16 %v47
    %v75 = vunpack.c.h.b16 %v47
    %v76 = vunpack.c.l.b16 %v48
    %v77 = vunpack.c.h.b16 %v48
    %v78 = vunpack.c.l.b16 %v49
    %v79 = vunpack.c.h.b16 %v49
    %v80 = vunpack.c.l.b16 %v50
    %v81 = vunpack.c.h.b16 %v50
    %v82 = vunpack.c.l.b16 %v51
    %v83 = vunpack.c.h.b16 %v51
    %v84 = vunpack.c.l.b16 %v52
    %v85 = vunpack.c.h.b16 %v52
    %v86 = vunpack.c.l.b16 %v53
    %v87 = vunpack.c.h.b16 %v53
    %v88 = vpack.c.b16 %v76, %v72
    %v89 = vpack.c.b16 %v77, %v73
    %v90 = vpack.c.b16 %v78, %v74
    %v91 = vpack.c.b16 %v79, %v75
    %v92 = vpack.c.b16 %v84, %v80
    %v93 = vpack.c.b16 %v85, %v81
    %v94 = vpack.c.b16 %v86, %v82
    %v95 = vpack.c.b16 %v87, %v83
    %vm104 = vcmask 261120
    %v106 = vsel %vm104, %v45, 0
    %108 = vmatpush.bf16.msra.mxu0 0
    %109 = vmatpush.bf16.msra.mxu0 0
    %110 = vmatpush.bf16.msra.mxu0 0
    %111 = vmatpush.bf16.msra.mxu0 0
    %112 = vmatpush.bf16.msra.mxu0 0
    %113 = vmatpush.bf16.msra.mxu0 0
    %114 = vmatpush.bf16.msra.mxu0 %v92
    %115 = vmatpush.bf16.msra.mxu0 %v88
    %116 = vmatmul.bf16.gmra.mxu0 %v106
    %v117 = vpop.f32.mrf.mxu0
    %v118 = vadd.f32 %v56, %v117
    %v119 = vpop.f32.mrf.mxu0
    %v120 = vadd.f32 %v56, %v119
    %121 = vdwg.mxu0
    %122 = vmatpush.bf16.msra.mxu0 0
    %123 = vmatpush.bf16.msra.mxu0 0
    %124 = vmatpush.bf16.msra.mxu0 0
    %125 = vmatpush.bf16.msra.mxu0 0
    %126 = vmatpush.bf16.msra.mxu0 0
    %127 = vmatpush.bf16.msra.mxu0 0
    %128 = vmatpush.bf16.msra.mxu0 %v93
    %129 = vmatpush.bf16.msra.mxu0 %v89
    %130 = vmatmul.bf16.gmra.mxu0 %v106
    %v131 = vpop.f32.mrf.mxu0
    %v132 = vadd.f32 %v57, %v131
    %v133 = vpop.f32.mrf.mxu0
    %v134 = vadd.f32 %v57, %v133
    %135 = vdwg.mxu0
    %136 = vmatpush.bf16.msra.mxu0 0
    %137 = vmatpush.bf16.msra.mxu0 0
    %138 = vmatpush.bf16.msra.mxu0 0
    %139 = vmatpush.bf16.msra.mxu0 0
    %140 = vmatpush.bf16.msra.mxu0 0
    %141 = vmatpush.bf16.msra.mxu0 0
    %142 = vmatpush.bf16.msra.mxu0 %v94
    %143 = vmatpush.bf16.msra.mxu0 %v90
    %144 = vmatmul.bf16.gmra.mxu0 %v106
    %v145 = vpop.f32.mrf.mxu0
    %v146 = vadd.f32 %v58, %v145
    %v147 = vpop.f32.mrf.mxu0
    %v148 = vadd.f32 %v58, %v147
    %149 = vdwg.mxu0
    %150 = vmatpush.bf16.msra.mxu0 0
    %151 = vmatpush.bf16.msra.mxu0 0
    %152 = vmatpush.bf16.msra.mxu0 0
    %153 = vmatpush.bf16.msra.mxu0 0
    %154 = vmatpush.bf16.msra.mxu0 0
    %155 = vmatpush.bf16.msra.mxu0 0
    %156 = vmatpush.bf16.msra.mxu0 %v95
    %157 = vmatpush.bf16.msra.mxu0 %v91
    %158 = vmatmul.bf16.gmra.mxu0 %v106
    %v159 = vpop.f32.mrf.mxu0
    %v160 = vadd.f32 %v59, %v159
    %v161 = vpop.f32.mrf.mxu0
    %v162 = vadd.f32 %v59, %v161
    %163 = vdwg.mxu0
    %v164 = vmul.f32 %v118, 0.01
    %v165 = vmul.f32 %v132, 0.01
    %v166 = vmul.f32 %v146, 0.01
    %v167 = vmul.f32 %v160, 0.01
    %v168 = vmul.f32 %v120, 0.01
    %v169 = vmul.f32 %v134, 0.01
    %v170 = vmul.f32 %v148, 0.01
    %v171 = vmul.f32 %v162, 0.01
    %v172 = vmax.f32 %v118, %v164
    %v173 = vmax.f32 %v132, %v165
    %v174 = vmax.f32 %v146, %v166
    %v175 = vmax.f32 %v160, %v167
    %v176 = vmax.f32 %v120, %v168
    %v177 = vmax.f32 %v134, %v169
    %v178 = vmax.f32 %v148, %v170
    %v179 = vmax.f32 %v162, %v171
    %v180 = vpack.c.bf16 %v176, %v172
    %v181 = vpack.c.bf16 %v177, %v173
    %v182 = vpack.c.bf16 %v178, %v174
    %v183 = vpack.c.bf16 %v179, %v175
    %v184 = vld [vmem:[#allocation2] sm:$0xff]
    %v185 = vld [vmem:[#allocation2 + $0x8] sm:$0xff]
    %v186 = vld [vmem:[#allocation2 + $0x10] sm:$0xff]
    %v187 = vld [vmem:[#allocation2 + $0x18] sm:$0xff]
    %v188 = vld [vmem:[#allocation2 + $0x20] sm:$0xff]
    %v189 = vld [vmem:[#allocation2 + $0x28] sm:$0xff]
    %v190 = vld [vmem:[#allocation2 + $0x30] sm:$0xff]
    %v191 = vld [vmem:[#allocation2 + $0x38] sm:$0xff]
    %v192 = vld [vmem:[#allocation2 + $0x40] sm:$0xff]
    %v193 = vld [vmem:[#allocation2 + $0x48] sm:$0xff]
    %v194 = vld [vmem:[#allocation2 + $0x50] sm:$0xff]
    %v195 = vld [vmem:[#allocation2 + $0x58] sm:$0xff]
    %v196 = vld [vmem:[#allocation2 + $0x60] sm:$0xff]
    %v197 = vld [vmem:[#allocation2 + $0x68] sm:$0xff]
    %v198 = vld [vmem:[#allocation2 + $0x70] sm:$0xff]
    %v199 = vld [vmem:[#allocation2 + $0x78] sm:$0xff]
    %v200 = vld [vmem:[#allocation2 + $0x80] sm:$0xff]
    %v201 = vld [vmem:[#allocation2 + $0x88] sm:$0xff]
    %v202 = vld [vmem:[#allocation2 + $0x90] sm:$0xff]
    %v203 = vld [vmem:[#allocation2 + $0x98] sm:$0xff]
    %v204 = vld [vmem:[#allocation2 + $0xa0] sm:$0xff]
    %v205 = vld [vmem:[#allocation2 + $0xa8] sm:$0xff]
    %v206 = vld [vmem:[#allocation2 + $0xb0] sm:$0xff]
    %v207 = vld [vmem:[#allocation2 + $0xb8] sm:$0xff]
    %v208 = vld [vmem:[#allocation2 + $0xc0] sm:$0xff]
    %v209 = vld [vmem:[#allocation2 + $0xc8] sm:$0xff]
    %v210 = vld [vmem:[#allocation2 + $0xd0] sm:$0xff]
    %v211 = vld [vmem:[#allocation2 + $0xd8] sm:$0xff]
    %v212 = vld [vmem:[#allocation2 + $0xe0] sm:$0xff]
    %v213 = vld [vmem:[#allocation2 + $0xe8] sm:$0xff]
    %v214 = vld [vmem:[#allocation2 + $0xf0] sm:$0xff]
    %v215 = vld [vmem:[#allocation2 + $0xf8] sm:$0xff]
    %v216 = vld [vmem:[#allocation2 + $0x100] sm:$0xff]
    %v217 = vld [vmem:[#allocation2 + $0x108] sm:$0xff]
    %v218 = vld [vmem:[#allocation2 + $0x110] sm:$0xff]
    %v219 = vld [vmem:[#allocation2 + $0x118] sm:$0xff]
    %v220 = vld [vmem:[#allocation2 + $0x120] sm:$0xff]
    %v221 = vld [vmem:[#allocation2 + $0x128] sm:$0xff]
    %v222 = vld [vmem:[#allocation2 + $0x130] sm:$0xff]
    %v223 = vld [vmem:[#allocation2 + $0x138] sm:$0xff]
    %v224 = vld [vmem:[#allocation2 + $0x140] sm:$0xff]
    %v225 = vld [vmem:[#allocation2 + $0x148] sm:$0xff]
    %v226 = vld [vmem:[#allocation2 + $0x150] sm:$0xff]
    %v227 = vld [vmem:[#allocation2 + $0x158] sm:$0xff]
    %v228 = vld [vmem:[#allocation2 + $0x160] sm:$0xff]
    %v229 = vld [vmem:[#allocation2 + $0x168] sm:$0xff]
    %v230 = vld [vmem:[#allocation2 + $0x170] sm:$0xff]
    %v231 = vld [vmem:[#allocation2 + $0x178] sm:$0xff]
    %v232 = vld [vmem:[#allocation2 + $0x180] sm:$0xff]
    %v233 = vld [vmem:[#allocation2 + $0x188] sm:$0xff]
    %v234 = vld [vmem:[#allocation2 + $0x190] sm:$0xff]
    %v235 = vld [vmem:[#allocation2 + $0x198] sm:$0xff]
    %v236 = vld [vmem:[#allocation2 + $0x1a0] sm:$0xff]
    %v237 = vld [vmem:[#allocation2 + $0x1a8] sm:$0xff]
    %v238 = vld [vmem:[#allocation2 + $0x1b0] sm:$0xff]
    %v239 = vld [vmem:[#allocation2 + $0x1b8] sm:$0xff]
    %v240 = vld [vmem:[#allocation2 + $0x1c0] sm:$0xff]
    %v241 = vld [vmem:[#allocation2 + $0x1c8] sm:$0xff]
    %v242 = vld [vmem:[#allocation2 + $0x1d0] sm:$0xff]
    %v243 = vld [vmem:[#allocation2 + $0x1d8] sm:$0xff]
    %v244 = vld [vmem:[#allocation2 + $0x1e0] sm:$0xff]
    %v245 = vld [vmem:[#allocation2 + $0x1e8] sm:$0xff]
    %v246 = vld [vmem:[#allocation2 + $0x1f0] sm:$0xff]
    %v247 = vld [vmem:[#allocation2 + $0x1f8] sm:$0xff]
    %v248 = vld [vmem:[%s4] sm:$0x3]
    %v250 = vperm.slane %v248, 0
    %v251 = vperm.slane %v248, 1
    %v318 = vunpack.c.l.b16 %v184
    %v319 = vunpack.c.h.b16 %v184
    %v320 = vunpack.c.l.b16 %v185
    %v321 = vunpack.c.h.b16 %v185
    %v322 = vunpack.c.l.b16 %v186
    %v323 = vunpack.c.h.b16 %v186
    %v324 = vunpack.c.l.b16 %v187
    %v325 = vunpack.c.h.b16 %v187
    %v326 = vunpack.c.l.b16 %v188
    %v327 = vunpack.c.h.b16 %v188
    %v328 = vunpack.c.l.b16 %v189
    %v329 = vunpack.c.h.b16 %v189
    %v330 = vunpack.c.l.b16 %v190
    %v331 = vunpack.c.h.b16 %v190
    %v332 = vunpack.c.l.b16 %v191
    %v333 = vunpack.c.h.b16 %v191
    %v334 = vunpack.c.l.b16 %v192
    %v335 = vunpack.c.h.b16 %v192
    %v336 = vunpack.c.l.b16 %v193
    %v337 = vunpack.c.h.b16 %v193
    %v338 = vunpack.c.l.b16 %v194
    %v339 = vunpack.c.h.b16 %v194
    %v340 = vunpack.c.l.b16 %v195
    %v341 = vunpack.c.h.b16 %v195
    %v342 = vunpack.c.l.b16 %v196
    %v343 = vunpack.c.h.b16 %v196
    %v344 = vunpack.c.l.b16 %v197
    %v345 = vunpack.c.h.b16 %v197
    %v346 = vunpack.c.l.b16 %v198
    %v347 = vunpack.c.h.b16 %v198
    %v348 = vunpack.c.l.b16 %v199
    %v349 = vunpack.c.h.b16 %v199
    %v350 = vunpack.c.l.b16 %v200
    %v351 = vunpack.c.h.b16 %v200
    %v352 = vunpack.c.l.b16 %v201
    %v353 = vunpack.c.h.b16 %v201
    %v354 = vunpack.c.l.b16 %v202
    %v355 = vunpack.c.h.b16 %v202
    %v356 = vunpack.c.l.b16 %v203
    %v357 = vunpack.c.h.b16 %v203
    %v358 = vunpack.c.l.b16 %v204
    %v359 = vunpack.c.h.b16 %v204
    %v360 = vunpack.c.l.b16 %v205
    %v361 = vunpack.c.h.b16 %v205
    %v362 = vunpack.c.l.b16 %v206
    %v363 = vunpack.c.h.b16 %v206
    %v364 = vunpack.c.l.b16 %v207
    %v365 = vunpack.c.h.b16 %v207
    %v366 = vunpack.c.l.b16 %v208
    %v367 = vunpack.c.h.b16 %v208
    %v368 = vunpack.c.l.b16 %v209
    %v369 = vunpack.c.h.b16 %v209
    %v370 = vunpack.c.l.b16 %v210
    %v371 = vunpack.c.h.b16 %v210
    %v372 = vunpack.c.l.b16 %v211
    %v373 = vunpack.c.h.b16 %v211
    %v374 = vunpack.c.l.b16 %v212
    %v375 = vunpack.c.h.b16 %v212
    %v376 = vunpack.c.l.b16 %v213
    %v377 = vunpack.c.h.b16 %v213
    %v378 = vunpack.c.l.b16 %v214
    %v379 = vunpack.c.h.b16 %v214
    %v380 = vunpack.c.l.b16 %v215
    %v381 = vunpack.c.h.b16 %v215
    %v382 = vunpack.c.l.b16 %v216
    %v383 = vunpack.c.h.b16 %v216
    %v384 = vunpack.c.l.b16 %v217
    %v385 = vunpack.c.h.b16 %v217
    %v386 = vunpack.c.l.b16 %v218
    %v387 = vunpack.c.h.b16 %v218
    %v388 = vunpack.c.l.b16 %v219
    %v389 = vunpack.c.h.b16 %v219
    %v390 = vunpack.c.l.b16 %v220
    %v391 = vunpack.c.h.b16 %v220
    %v392 = vunpack.c.l.b16 %v221
    %v393 = vunpack.c.h.b16 %v221
    %v394 = vunpack.c.l.b16 %v222
    %v395 = vunpack.c.h.b16 %v222
    %v396 = vunpack.c.l.b16 %v223
    %v397 = vunpack.c.h.b16 %v223
    %v398 = vunpack.c.l.b16 %v224
    %v399 = vunpack.c.h.b16 %v224
    %v400 = vunpack.c.l.b16 %v225
    %v401 = vunpack.c.h.b16 %v225
    %v402 = vunpack.c.l.b16 %v226
    %v403 = vunpack.c.h.b16 %v226
    %v404 = vunpack.c.l.b16 %v227
    %v405 = vunpack.c.h.b16 %v227
    %v406 = vunpack.c.l.b16 %v228
    %v407 = vunpack.c.h.b16 %v228
    %v408 = vunpack.c.l.b16 %v229
    %v409 = vunpack.c.h.b16 %v229
    %v410 = vunpack.c.l.b16 %v230
    %v411 = vunpack.c.h.b16 %v230
    %v412 = vunpack.c.l.b16 %v231
    %v413 = vunpack.c.h.b16 %v231
    %v414 = vunpack.c.l.b16 %v232
    %v415 = vunpack.c.h.b16 %v232
    %v416 = vunpack.c.l.b16 %v233
    %v417 = vunpack.c.h.b16 %v233
    %v418 = vunpack.c.l.b16 %v234
    %v419 = vunpack.c.h.b16 %v234
    %v420 = vunpack.c.l.b16 %v235
    %v421 = vunpack.c.h.b16 %v235
    %v422 = vunpack.c.l.b16 %v236
    %v423 = vunpack.c.h.b16 %v236
    %v424 = vunpack.c.l.b16 %v237
    %v425 = vunpack.c.h.b16 %v237
    %v426 = vunpack.c.l.b16 %v238
    %v427 = vunpack.c.h.b16 %v238
    %v428 = vunpack.c.l.b16 %v239
    %v429 = vunpack.c.h.b16 %v239
    %v430 = vunpack.c.l.b16 %v240
    %v431 = vunpack.c.h.b16 %v240
    %v432 = vunpack.c.l.b16 %v241
    %v433 = vunpack.c.h.b16 %v241
    %v434 = vunpack.c.l.b16 %v242
    %v435 = vunpack.c.h.b16 %v242
    %v436 = vunpack.c.l.b16 %v243
    %v437 = vunpack.c.h.b16 %v243
    %v438 = vunpack.c.l.b16 %v244
    %v439 = vunpack.c.h.b16 %v244
    %v440 = vunpack.c.l.b16 %v245
    %v441 = vunpack.c.h.b16 %v245
    %v442 = vunpack.c.l.b16 %v246
    %v443 = vunpack.c.h.b16 %v246
    %v444 = vunpack.c.l.b16 %v247
    %v445 = vunpack.c.h.b16 %v247
    %v446 = vpack.c.b16 %v320, %v318
    %v447 = vpack.c.b16 %v321, %v319
    %v448 = vpack.c.b16 %v324, %v322
    %v449 = vpack.c.b16 %v325, %v323
    %v450 = vpack.c.b16 %v328, %v326
    %v451 = vpack.c.b16 %v329, %v327
    %v452 = vpack.c.b16 %v332, %v330
    %v453 = vpack.c.b16 %v333, %v331
    %v454 = vpack.c.b16 %v336, %v334
    %v455 = vpack.c.b16 %v337, %v335
    %v456 = vpack.c.b16 %v340, %v338
    %v457 = vpack.c.b16 %v341, %v339
    %v458 = vpack.c.b16 %v344, %v342
    %v459 = vpack.c.b16 %v345, %v343
    %v460 = vpack.c.b16 %v348, %v346
    %v461 = vpack.c.b16 %v349, %v347
    %v462 = vpack.c.b16 %v352, %v350
    %v463 = vpack.c.b16 %v353, %v351
    %v464 = vpack.c.b16 %v356, %v354
    %v465 = vpack.c.b16 %v357, %v355
    %v466 = vpack.c.b16 %v360, %v358
    %v467 = vpack.c.b16 %v361, %v359
    %v468 = vpack.c.b16 %v364, %v362
    %v469 = vpack.c.b16 %v365, %v363
    %v470 = vpack.c.b16 %v368, %v366
    %v471 = vpack.c.b16 %v369, %v367
    %v472 = vpack.c.b16 %v372, %v370
    %v473 = vpack.c.b16 %v373, %v371
    %v474 = vpack.c.b16 %v376, %v374
    %v475 = vpack.c.b16 %v377, %v375
    %v476 = vpack.c.b16 %v380, %v378
    %v477 = vpack.c.b16 %v381, %v379
    %v478 = vpack.c.b16 %v384, %v382
    %v479 = vpack.c.b16 %v385, %v383
    %v480 = vpack.c.b16 %v388, %v386
    %v481 = vpack.c.b16 %v389, %v387
    %v482 = vpack.c.b16 %v392, %v390
    %v483 = vpack.c.b16 %v393, %v391
    %v484 = vpack.c.b16 %v396, %v394
    %v485 = vpack.c.b16 %v397, %v395
    %v486 = vpack.c.b16 %v400, %v398
    %v487 = vpack.c.b16 %v401, %v399
    %v488 = vpack.c.b16 %v404, %v402
    %v489 = vpack.c.b16 %v405, %v403
    %v490 = vpack.c.b16 %v408, %v406
    %v491 = vpack.c.b16 %v409, %v407
    %v492 = vpack.c.b16 %v412, %v410
    %v493 = vpack.c.b16 %v413, %v411
    %v494 = vpack.c.b16 %v416, %v414
    %v495 = vpack.c.b16 %v417, %v415
    %v496 = vpack.c.b16 %v420, %v418
    %v497 = vpack.c.b16 %v421, %v419
    %v498 = vpack.c.b16 %v424, %v422
    %v499 = vpack.c.b16 %v425, %v423
    %v500 = vpack.c.b16 %v428, %v426
    %v501 = vpack.c.b16 %v429, %v427
    %v502 = vpack.c.b16 %v432, %v430
    %v503 = vpack.c.b16 %v433, %v431
    %v504 = vpack.c.b16 %v436, %v434
    %v505 = vpack.c.b16 %v437, %v435
    %v506 = vpack.c.b16 %v440, %v438
    %v507 = vpack.c.b16 %v441, %v439
    %v508 = vpack.c.b16 %v444, %v442
    %v509 = vpack.c.b16 %v445, %v443
    %574 = vmatpush.bf16.msra.mxu0 %v460
    %575 = vmatpush.bf16.msra.mxu0 %v458
    %576 = vmatpush.bf16.msra.mxu0 %v456
    %577 = vmatpush.bf16.msra.mxu0 %v454
    %578 = vmatpush.bf16.msra.mxu0 %v452
    %579 = vmatpush.bf16.msra.mxu0 %v450
    %580 = vmatpush.bf16.msra.mxu0 %v448
    %581 = vmatpush.bf16.msra.mxu0 %v446
    %582 = vmatmul.bf16.gmra.mxu0 %v180
    %v583 = vpop.f32.mrf.mxu0
    %v584 = vadd.f32 %v250, %v583
    %v585 = vpop.f32.mrf.mxu0
    %v586 = vadd.f32 %v250, %v585
    %587 = vdwg.mxu0
    %588 = vmatpush.bf16.msra.mxu0 %v476
    %589 = vmatpush.bf16.msra.mxu0 %v474
    %590 = vmatpush.bf16.msra.mxu0 %v472
    %591 = vmatpush.bf16.msra.mxu0 %v470
    %592 = vmatpush.bf16.msra.mxu0 %v468
    %593 = vmatpush.bf16.msra.mxu0 %v466
    %594 = vmatpush.bf16.msra.mxu0 %v464
    %595 = vmatpush.bf16.msra.mxu0 %v462
    %596 = vmatmul.bf16.gmra.mxu0 %v181
    %v597 = vpop.f32.mrf.mxu0
    %v598 = vadd.f32 %v584, %v597
    %v599 = vpop.f32.mrf.mxu0
    %v600 = vadd.f32 %v586, %v599
    %601 = vdwg.mxu0
    %602 = vmatpush.bf16.msra.mxu0 %v492
    %603 = vmatpush.bf16.msra.mxu0 %v490
    %604 = vmatpush.bf16.msra.mxu0 %v488
    %605 = vmatpush.bf16.msra.mxu0 %v486
    %606 = vmatpush.bf16.msra.mxu0 %v484
    %607 = vmatpush.bf16.msra.mxu0 %v482
    %608 = vmatpush.bf16.msra.mxu0 %v480
    %609 = vmatpush.bf16.msra.mxu0 %v478
    %610 = vmatmul.bf16.gmra.mxu0 %v182
    %v611 = vpop.f32.mrf.mxu0
    %v612 = vadd.f32 %v598, %v611
    %v613 = vpop.f32.mrf.mxu0
    %v614 = vadd.f32 %v600, %v613
    %615 = vdwg.mxu0
    %616 = vmatpush.bf16.msra.mxu0 %v508
    %617 = vmatpush.bf16.msra.mxu0 %v506
    %618 = vmatpush.bf16.msra.mxu0 %v504
    %619 = vmatpush.bf16.msra.mxu0 %v502
    %620 = vmatpush.bf16.msra.mxu0 %v500
    %621 = vmatpush.bf16.msra.mxu0 %v498
    %622 = vmatpush.bf16.msra.mxu0 %v496
    %623 = vmatpush.bf16.msra.mxu0 %v494
    %624 = vmatmul.bf16.gmra.mxu0 %v183
    %v625 = vpop.f32.mrf.mxu0
    %v626 = vadd.f32 %v612, %v625
    %v627 = vpop.f32.mrf.mxu0
    %v628 = vadd.f32 %v614, %v627
    %629 = vdwg.mxu0
    %630 = vmatpush.bf16.msra.mxu0 %v461
    %631 = vmatpush.bf16.msra.mxu0 %v459
    %632 = vmatpush.bf16.msra.mxu0 %v457
    %633 = vmatpush.bf16.msra.mxu0 %v455
    %634 = vmatpush.bf16.msra.mxu0 %v453
    %635 = vmatpush.bf16.msra.mxu0 %v451
    %636 = vmatpush.bf16.msra.mxu0 %v449
    %637 = vmatpush.bf16.msra.mxu0 %v447
    %638 = vmatmul.bf16.gmra.mxu0 %v180
    %v639 = vpop.f32.mrf.mxu0
    %v640 = vadd.f32 %v251, %v639
    %v641 = vpop.f32.mrf.mxu0
    %v642 = vadd.f32 %v251, %v641
    %643 = vdwg.mxu0
    %644 = vmatpush.bf16.msra.mxu0 %v477
    %645 = vmatpush.bf16.msra.mxu0 %v475
    %646 = vmatpush.bf16.msra.mxu0 %v473
    %647 = vmatpush.bf16.msra.mxu0 %v471
    %648 = vmatpush.bf16.msra.mxu0 %v469
    %649 = vmatpush.bf16.msra.mxu0 %v467
    %650 = vmatpush.bf16.msra.mxu0 %v465
    %651 = vmatpush.bf16.msra.mxu0 %v463
    %652 = vmatmul.bf16.gmra.mxu0 %v181
    %v653 = vpop.f32.mrf.mxu0
    %v654 = vadd.f32 %v640, %v653
    %v655 = vpop.f32.mrf.mxu0
    %v656 = vadd.f32 %v642, %v655
    %657 = vdwg.mxu0
    %658 = vmatpush.bf16.msra.mxu0 %v493
    %659 = vmatpush.bf16.msra.mxu0 %v491
    %660 = vmatpush.bf16.msra.mxu0 %v489
    %661 = vmatpush.bf16.msra.mxu0 %v487
    %662 = vmatpush.bf16.msra.mxu0 %v485
    %663 = vmatpush.bf16.msra.mxu0 %v483
    %664 = vmatpush.bf16.msra.mxu0 %v481
    %665 = vmatpush.bf16.msra.mxu0 %v479
    %666 = vmatmul.bf16.gmra.mxu0 %v182
    %v667 = vpop.f32.mrf.mxu0
    %v668 = vadd.f32 %v654, %v667
    %v669 = vpop.f32.mrf.mxu0
    %v670 = vadd.f32 %v656, %v669
    %671 = vdwg.mxu0
    %672 = vmatpush.bf16.msra.mxu0 %v509
    %673 = vmatpush.bf16.msra.mxu0 %v507
    %674 = vmatpush.bf16.msra.mxu0 %v505
    %675 = vmatpush.bf16.msra.mxu0 %v503
    %676 = vmatpush.bf16.msra.mxu0 %v501
    %677 = vmatpush.bf16.msra.mxu0 %v499
    %678 = vmatpush.bf16.msra.mxu0 %v497
    %679 = vmatpush.bf16.msra.mxu0 %v495
    %680 = vmatmul.bf16.gmra.mxu0 %v183
    %v681 = vpop.f32.mrf.mxu0
    %v682 = vadd.f32 %v668, %v681
    %v683 = vpop.f32.mrf.mxu0
    %v684 = vadd.f32 %v670, %v683
    %685 = vdwg.mxu0
    %v686 = vmul.f32 %v626, 0.01
    %v687 = vmul.f32 %v682, 0.01
    %v688 = vmul.f32 %v628, 0.01
    %v689 = vmul.f32 %v684, 0.01
    %v690 = vmax.f32 %v626, %v686
    %v691 = vmax.f32 %v682, %v687
    %v692 = vmax.f32 %v628, %v688
    %v693 = vmax.f32 %v684, %v689
    %v694 = vpack.c.bf16 %v692, %v690
    %v695 = vpack.c.bf16 %v693, %v691
    %v696 = vld [vmem:[%s5] sm:$0xf]
    %v697 = vld [vmem:[%s5 + $0x4] sm:$0xf]
    %v698 = vld [vmem:[%s5 + $0x8] sm:$0xf]
    %v699 = vld [vmem:[%s5 + $0xc] sm:$0xf]
    %v700 = vld [vmem:[%s5 + $0x10] sm:$0xf]
    %v701 = vld [vmem:[%s5 + $0x14] sm:$0xf]
    %v702 = vld [vmem:[%s5 + $0x18] sm:$0xf]
    %v703 = vld [vmem:[%s5 + $0x1c] sm:$0xf]
    %v704 = vld [vmem:[%s5 + $0x20] sm:$0xf]
    %v705 = vld [vmem:[%s5 + $0x24] sm:$0xf]
    %v706 = vld [vmem:[%s5 + $0x28] sm:$0xf]
    %v707 = vld [vmem:[%s5 + $0x2c] sm:$0xf]
    %v708 = vld [vmem:[%s5 + $0x30] sm:$0xf]
    %v709 = vld [vmem:[%s5 + $0x34] sm:$0xf]
    %v710 = vld [vmem:[%s5 + $0x38] sm:$0xf]
    %v711 = vld [vmem:[%s5 + $0x3c] sm:$0xf]
    %v712 = vld [vmem:[%s5 + $0x40] sm:$0xf]
    %v713 = vld [vmem:[%s5 + $0x44] sm:$0xf]
    %v714 = vld [vmem:[%s5 + $0x48] sm:$0xf]
    %v715 = vld [vmem:[%s5 + $0x4c] sm:$0xf]
    %v716 = vld [vmem:[%s5 + $0x50] sm:$0xf]
    %v717 = vld [vmem:[%s5 + $0x54] sm:$0xf]
    %v718 = vld [vmem:[%s5 + $0x58] sm:$0xf]
    %v719 = vld [vmem:[%s5 + $0x5c] sm:$0xf]
    %v720 = vld [vmem:[%s5 + $0x60] sm:$0xf]
    %v721 = vld [vmem:[%s5 + $0x64] sm:$0xf]
    %v722 = vld [vmem:[%s5 + $0x68] sm:$0xf]
    %v723 = vld [vmem:[%s5 + $0x6c] sm:$0xf]
    %v724 = vld [vmem:[%s5 + $0x70] sm:$0xf]
    %v725 = vld [vmem:[%s5 + $0x74] sm:$0xf]
    %v726 = vld [vmem:[%s5 + $0x78] sm:$0xf]
    %v727 = vld [vmem:[%s5 + $0x7c] sm:$0xf]
    %v728 = vld [vmem:[%s6] sm:$0x1]
    %v730 = vperm.slane %v728, 0
    %v764 = vunpack.c.l.b16 %v696
    %v765 = vunpack.c.l.b16 %v697
    %v766 = vunpack.c.l.b16 %v698
    %v767 = vunpack.c.l.b16 %v699
    %v768 = vunpack.c.l.b16 %v700
    %v769 = vunpack.c.l.b16 %v701
    %v770 = vunpack.c.l.b16 %v702
    %v771 = vunpack.c.l.b16 %v703
    %v772 = vunpack.c.l.b16 %v704
    %v773 = vunpack.c.l.b16 %v705
    %v774 = vunpack.c.l.b16 %v706
    %v775 = vunpack.c.l.b16 %v707
    %v776 = vunpack.c.l.b16 %v708
    %v777 = vunpack.c.l.b16 %v709
    %v778 = vunpack.c.l.b16 %v710
    %v779 = vunpack.c.l.b16 %v711
    %v780 = vunpack.c.l.b16 %v712
    %v781 = vunpack.c.l.b16 %v713
    %v782 = vunpack.c.l.b16 %v714
    %v783 = vunpack.c.l.b16 %v715
    %v784 = vunpack.c.l.b16 %v716
    %v785 = vunpack.c.l.b16 %v717
    %v786 = vunpack.c.l.b16 %v718
    %v787 = vunpack.c.l.b16 %v719
    %v788 = vunpack.c.l.b16 %v720
    %v789 = vunpack.c.l.b16 %v721
    %v790 = vunpack.c.l.b16 %v722
    %v791 = vunpack.c.l.b16 %v723
    %v792 = vunpack.c.l.b16 %v724
    %v793 = vunpack.c.l.b16 %v725
    %v794 = vunpack.c.l.b16 %v726
    %v795 = vunpack.c.l.b16 %v727
    %v796 = vpack.c.b16 %v765, %v764
    %v797 = vpack.c.b16 %v767, %v766
    %v798 = vpack.c.b16 %v769, %v768
    %v799 = vpack.c.b16 %v771, %v770
    %v800 = vpack.c.b16 %v773, %v772
    %v801 = vpack.c.b16 %v775, %v774
    %v802 = vpack.c.b16 %v777, %v776
    %v803 = vpack.c.b16 %v779, %v778
    %v804 = vpack.c.b16 %v781, %v780
    %v805 = vpack.c.b16 %v783, %v782
    %v806 = vpack.c.b16 %v785, %v784
    %v807 = vpack.c.b16 %v787, %v786
    %v808 = vpack.c.b16 %v789, %v788
    %v809 = vpack.c.b16 %v791, %v790
    %v810 = vpack.c.b16 %v793, %v792
    %v811 = vpack.c.b16 %v795, %v794
    %828 = vmatpush.bf16.msra.mxu0 %v803
    %829 = vmatpush.bf16.msra.mxu0 %v802
    %830 = vmatpush.bf16.msra.mxu0 %v801
    %831 = vmatpush.bf16.msra.mxu0 %v800
    %832 = vmatpush.bf16.msra.mxu0 %v799
    %833 = vmatpush.bf16.msra.mxu0 %v798
    %834 = vmatpush.bf16.msra.mxu0 %v797
    %835 = vmatpush.bf16.msra.mxu0 %v796
    %836 = vmatmul.bf16.gmra.mxu0 %v694
    %v837 = vpop.f32.mrf.mxu0
    %v838 = vadd.f32 %v730, %v837
    %v839 = vpop.f32.mrf.mxu0
    %v840 = vadd.f32 %v730, %v839
    %841 = vdwg.mxu0
    %842 = vmatpush.bf16.msra.mxu0 %v811
    %843 = vmatpush.bf16.msra.mxu0 %v810
    %844 = vmatpush.bf16.msra.mxu0 %v809
    %845 = vmatpush.bf16.msra.mxu0 %v808
    %846 = vmatpush.bf16.msra.mxu0 %v807
    %847 = vmatpush.bf16.msra.mxu0 %v806
    %848 = vmatpush.bf16.msra.mxu0 %v805
    %849 = vmatpush.bf16.msra.mxu0 %v804
    %850 = vmatmul.bf16.gmra.mxu0 %v695
    %v851 = vpop.f32.mrf.mxu0
    %v852 = vadd.f32 %v838, %v851
    %v853 = vpop.f32.mrf.mxu0
    %v854 = vadd.f32 %v840, %v853
    %855 = vdwg.mxu0
    %v856 = vmul.f32 %v852, 0.01
    %v857 = vmul.f32 %v854, 0.01
    %v858 = vmax.f32 %v852, %v856
    %v859 = vmax.f32 %v854, %v857
    %vm860 = vcmask 130048
    %861 = vst.msk [vmem:[%s7] sm:$0xff] %vm860, %v858
    %862 = vst.msk [vmem:[%s7 + $0x8] sm:$0xff] %vm860, %v859
    // Predicated region
    $region34: #{fx_forward.1} parent=1 // pred_check
      _
    $region35: #{fx_forward.1} parent=1 // pred_check_branch
      %864 = sbr.rel (0) target = $region37
    $region36: #{fx_forward.1} parent=1 // pred_region
      _
    $region37: #{fx_forward.1} parent=1 // pred_fallthru
      _
    // Predicated region
    $region38: #{fx_forward.1} parent=1 // pred_check
      _
    $region39: #{fx_forward.1} parent=1 // pred_check_branch
      %866 = sbr.rel (0) target = $region41
    $region40: #{fx_forward.1} parent=1 // pred_region
      _
    $region41: #{fx_forward.1} parent=1 // pred_fallthru
      _
    %867 = vsyncpa [#allocation3], 1

</llo_original>
